<compile_context>
chip_gen: v7x
topology: tpu7x:2x2x1
jax: 0.10.0
libtpu: 0.0.40
codegen_flags: <defaults>
</compile_context>

<pallas_src>
import jax
import jax.numpy as jnp
from jax.experimental import pallas as pl
from jax.experimental.pallas import tpu as pltpu


def classify_header4_kernel(x_ref, w1_ref, b1_ref, w2_ref, b2_ref, out_ref):
    # Block shapes:
    #   x_ref   : (TB, 2D)  lane-concat [nl | pl], float32
    #   w1_ref  : (2D, 2D)  dense weight stored transposed (in, out), MXU dtype
    #   b1_ref  : (1, 2D)   float32
    #   w2_ref  : (2D, 2)   output weight stored transposed (in, out), MXU dtype
    #   b2_ref  : (1, 2)    float32
    #   out_ref : (TB, 2)   float32 logits
    D2 = x_ref.shape[-1]
    D = D2 // 2

    x = x_ref[...]                              # [nl | pl]
    # Swap the two lane halves. shift = D = D2/2, so rotation direction is irrelevant.
    xr = pltpu.roll(x, shift=D, axis=1)         # [pl | nl]
    lane = jax.lax.broadcasted_iota(jnp.int32, x.shape, 1)
    # lanes [0, D)  : nl * pl       (multi)
    # lanes [D, 2D) : |pl - nl|     (diff)     -> lhs == cat([multi, diff], 1)
    lhs = jnp.where(lane < D, x * xr, jnp.abs(x - xr))

    # Single full-depth (K = 2D) MXU contraction, operands in W1's dtype (bf16 on
    # v6e/v7x), accumulation in f32.
    fuse = (
        jnp.dot(lhs.astype(w1_ref.dtype), w1_ref[...],
                preferred_element_type=jnp.float32)
        + b1_ref[...]
    )                                            # (TB, 2D), f32

    # sigmoid(x) == 0.5*tanh(0.5*x) + 0.5 : one EUP transcendental.
    sig = 0.5 * jnp.tanh(0.5 * fuse) + 0.5

    # TODO(synk): nn.Dropout(0.2) is identity in eval mode; training-mode dropout
    # (pltpu.prng_random_bits mask) intentionally omitted.

    out = (
        jnp.dot(sig.astype(w2_ref.dtype), w2_ref[...],
                preferred_element_type=jnp.float32)
        + b2_ref[...]
    )                                            # (TB, 2), f32
    out_ref[...] = out.astype(out_ref.dtype)


def classify_header4(nl_hidden, pl_hidden, w1, b1, w2, b2, *,
                     block_b=512, mxu_dtype=jnp.bfloat16):
    B, D = nl_hidden.shape
    D2 = 2 * D
    assert pl_hidden.shape == (B, D), pl_hidden.shape
    assert w1.shape == (D2, D2), w1.shape
    assert w2.shape == (D2, 2), w2.shape

    # Lane-concat the two encoder states once in the wrapper; the kernel derives
    # multi/diff from this single (B, 2D) operand with a lane-roll + select.
    x = jnp.concatenate([nl_hidden, pl_hidden], axis=1).astype(jnp.float32)

    # cdiv batch grid with a zero-padded last tile (never a single giant tile).
    tb = min(block_b, B)
    B_pad = pl.cdiv(B, tb) * tb
    if B_pad != B:
        x = jnp.pad(x, ((0, B_pad - B), (0, 0)))
    grid = (B_pad // tb,)

    w1c = jnp.asarray(w1).astype(mxu_dtype)
    w2c = jnp.asarray(w2).astype(mxu_dtype)
    b1r = jnp.asarray(b1).reshape(1, D2).astype(jnp.float32)
    b2r = jnp.asarray(b2).reshape(1, 2).astype(jnp.float32)

    out = pl.pallas_call(
        classify_header4_kernel,
        out_shape=jax.ShapeDtypeStruct((B_pad, 2), jnp.float32),
        grid=grid,
        in_specs=[
            pl.BlockSpec((tb, D2), lambda i: (i, 0)),    # x = [nl | pl]
            pl.BlockSpec((D2, D2), lambda i: (0, 0)),    # W1 (in, out)
            pl.BlockSpec((1, D2), lambda i: (0, 0)),     # b1
            pl.BlockSpec((D2, 2), lambda i: (0, 0)),     # W2 (in, out)
            pl.BlockSpec((1, 2), lambda i: (0, 0)),      # b2
        ],
        out_specs=pl.BlockSpec((tb, 2), lambda i: (i, 0)),
        compiler_params=pltpu.CompilerParams(
            # Batch axis is independent across tiles; shards across cores where
            # supported. (CORE_PARALLEL on v7x left as a follow-up sweep.)
            dimension_semantics=("parallel",),
        ),
    )(x, w1c, b1r, w2c, b2r)

    return out[:B]


def reference(nl_hidden, pl_hidden, w1, b1, w2, b2):
    fuse = jnp.concatenate(
        [nl_hidden * pl_hidden, jnp.abs(nl_hidden - pl_hidden)], axis=1)
    fuse = jnp.dot(fuse, w1, precision=jax.lax.Precision.HIGHEST) + b1.reshape(1, -1)
    sig = jax.nn.sigmoid(fuse)
    return jnp.dot(sig, w2, precision=jax.lax.Precision.HIGHEST) + b2.reshape(1, -1)


if __name__ == "__main__":
    # classifyHeader4(hidden_size=32, rnn_type='bi_gru'):
    #   bi = 2, per-encoder hidden dim D = hidden_size * bi = 64, dense width 2D = 128
    hidden_size = 32
    bi = 2
    D = hidden_size * bi          # 64
    D2 = hidden_size * 2 * bi     # 128
    B = 20                        # small batch, deliberately not a multiple of 8

    key = jax.random.PRNGKey(0)
    k_nl, k_pl, k_w1, k_b1, k_w2, k_b2 = jax.random.split(key, 6)

    nl_hidden = jax.random.normal(k_nl, (B, D), dtype=jnp.float32)
    pl_hidden = jax.random.normal(k_pl, (B, D), dtype=jnp.float32)

    # Synthetic parameters; nn.Linear weights stored transposed as (in, out).
    w1 = jax.random.normal(k_w1, (D2, D2), dtype=jnp.float32) * 0.05
    b1 = jax.random.normal(k_b1, (D2,), dtype=jnp.float32) * 0.05
    w2 = jax.random.normal(k_w2, (D2, 2), dtype=jnp.float32) * 0.05
    b2 = jax.random.normal(k_b2, (2,), dtype=jnp.float32) * 0.05

    ref = reference(nl_hidden, pl_hidden, w1, b1, w2, b2)

    # 1) f32 MXU operands, single tile: tight structural check of the roll/select LHS.
    out_f32 = classify_header4(nl_hidden, pl_hidden, w1, b1, w2, b2,
                               mxu_dtype=jnp.float32)
    jax.block_until_ready(out_f32)
    assert out_f32.shape == (B, 2)
    err_f32 = float(jnp.max(jnp.abs(out_f32 - ref)))
    assert jnp.allclose(out_f32, ref, atol=2e-3, rtol=2e-3), f"f32 max err {err_f32}"

    # 2) bf16 MXU operands + multi-tile cdiv grid with a padded ragged last tile
    #    (block_b=8 -> grid of 3 tiles, 4 padded rows sliced off).
    out_bf16 = classify_header4(nl_hidden, pl_hidden, w1, b1, w2, b2,
                                block_b=8, mxu_dtype=jnp.bfloat16)
    jax.block_until_ready(out_bf16)
    assert out_bf16.shape == (B, 2)
    err_bf16 = float(jnp.max(jnp.abs(out_bf16 - ref)))
    assert jnp.allclose(out_bf16, ref, atol=1e-2, rtol=1e-2), f"bf16 max err {err_bf16}"

    print("KERNEL_OK")
</pallas_src>

<mosaic_0001>
module attributes {stable_mosaic.version = 11 : i64} {
  func.func @classify_header4_kernel(%arg0: i32, %arg1: memref<20x128xf32, #tpu.memory_space<vmem>>, %arg2: memref<128x128xf32, #tpu.memory_space<vmem>>, %arg3: memref<1x128xf32, #tpu.memory_space<vmem>>, %arg4: memref<128x2xf32, #tpu.memory_space<vmem>>, %arg5: memref<1x2xf32, #tpu.memory_space<vmem>>, %arg6: memref<20x2xf32, #tpu.memory_space<vmem>>) attributes {dimension_semantics = [#tpu.dimension_semantics<parallel>], iteration_bounds = array<i64: 1>, scalar_prefetch = 0 : i64, scratch_operands = 0 : i64, tpu.core_type = #tpu.core_type<tc>, window_params = [{transform_indices = @transform_0, window_bounds = array<i64: 20, 128>}, {pipeline_mode = #tpu.pipeline_mode<synchronous>, transform_indices = @transform_1, window_bounds = array<i64: 128, 128>}, {pipeline_mode = #tpu.pipeline_mode<synchronous>, transform_indices = @transform_2, window_bounds = array<i64: 1, 128>}, {pipeline_mode = #tpu.pipeline_mode<synchronous>, transform_indices = @transform_3, window_bounds = array<i64: 128, 2>}, {pipeline_mode = #tpu.pipeline_mode<synchronous>, transform_indices = @transform_4, window_bounds = array<i64: 1, 2>}, {transform_indices = @transform_5, window_bounds = array<i64: 20, 2>}]} {
    %c0 = arith.constant 0 : index
    %c0_0 = arith.constant 0 : index
    %0 = vector.load %arg1[%c0, %c0_0] : memref<20x128xf32, #tpu.memory_space<vmem>>, vector<20x128xf32>
    %c64_i32 = arith.constant 64 : i32
    %1 = tpu.dynamic_rotate %0 by %c64_i32 dim 1 : vector<20x128xf32>, i32 -> vector<20x128xf32>
    %2 = tpu.iota {dimensions = array<i32: 1>} : vector<20x128xi32>
    %c64_i32_1 = arith.constant 64 : i32
    %3 = vector.broadcast %c64_i32_1 : i32 to vector<20x128xi32>
    %4 = arith.cmpi slt, %2, %3 : vector<20x128xi32>
    %5 = arith.mulf %0, %1 : vector<20x128xf32>
    %6 = arith.subf %0, %1 : vector<20x128xf32>
    %7 = math.absf %6 : vector<20x128xf32>
    %8 = arith.select %4, %5, %7 : vector<20x128xi1>, vector<20x128xf32>
    %c0_2 = arith.constant 0 : index
    %c0_3 = arith.constant 0 : index
    %9 = vector.load %arg2[%c0_2, %c0_3] : memref<128x128xf32, #tpu.memory_space<vmem>>, vector<128x128xf32>
    %cst = arith.constant dense<0.000000e+00> : vector<20x128xf32>
    %10 = tpu.matmul %8, %9, %cst {dimension_numbers = #tpu.dot_dimension_numbers<[1], [0], [0], [1], [0, 0, 1, 1], [], []>} : vector<20x128xf32>, vector<128x128xf32>, vector<20x128xf32> -> vector<20x128xf32>
    %c0_4 = arith.constant 0 : index
    %c0_5 = arith.constant 0 : index
    %11 = vector.load %arg3[%c0_4, %c0_5] : memref<1x128xf32, #tpu.memory_space<vmem>>, vector<1x128xf32>
    %12 = vector.broadcast %11 : vector<1x128xf32> to vector<20x128xf32>
    %13 = arith.addf %10, %12 : vector<20x128xf32>
    %cst_6 = arith.constant 5.000000e-01 : f32
    %14 = vector.broadcast %cst_6 : f32 to vector<20x128xf32>
    %15 = arith.mulf %14, %13 : vector<20x128xf32>
    %16 = math.tanh %15 : vector<20x128xf32>
    %cst_7 = arith.constant 5.000000e-01 : f32
    %17 = vector.broadcast %cst_7 : f32 to vector<20x128xf32>
    %18 = arith.mulf %17, %16 : vector<20x128xf32>
    %cst_8 = arith.constant 5.000000e-01 : f32
    %19 = vector.broadcast %cst_8 : f32 to vector<20x128xf32>
    %20 = arith.addf %18, %19 : vector<20x128xf32>
    %c0_9 = arith.constant 0 : index
    %c0_10 = arith.constant 0 : index
    %21 = vector.load %arg4[%c0_9, %c0_10] : memref<128x2xf32, #tpu.memory_space<vmem>>, vector<128x2xf32>
    %cst_11 = arith.constant dense<0.000000e+00> : vector<20x2xf32>
    %22 = tpu.matmul %20, %21, %cst_11 {dimension_numbers = #tpu.dot_dimension_numbers<[1], [0], [0], [1], [0, 0, 1, 1], [], []>} : vector<20x128xf32>, vector<128x2xf32>, vector<20x2xf32> -> vector<20x2xf32>
    %c0_12 = arith.constant 0 : index
    %c0_13 = arith.constant 0 : index
    %23 = vector.load %arg5[%c0_12, %c0_13] : memref<1x2xf32, #tpu.memory_space<vmem>>, vector<1x2xf32>
    %24 = vector.broadcast %23 : vector<1x2xf32> to vector<20x2xf32>
    %25 = arith.addf %22, %24 : vector<20x2xf32>
    %c0_14 = arith.constant 0 : index
    %c0_15 = arith.constant 0 : index
    %26 = vector.load %arg6[%c0_14, %c0_15] : memref<20x2xf32, #tpu.memory_space<vmem>>, vector<20x2xf32>
    tpu.vector_store %arg6[%c0_14, %c0_15], %25 {strides = array<i32>} : memref<20x2xf32, #tpu.memory_space<vmem>>, vector<20x2xf32>,
    return
  }
  func.func @transform_0(%arg0: i32) -> (i32, i32) {
    %c0_i32 = arith.constant 0 : i32
    %c0_i32_0 = arith.constant 0 : i32
    return %arg0, %c0_i32 : i32, i32
  }
  func.func @transform_1(%arg0: i32) -> (i32, i32) {
    %c0_i32 = arith.constant 0 : i32
    %c0_i32_0 = arith.constant 0 : i32
    %c0_i32_1 = arith.constant 0 : i32
    return %c0_i32, %c0_i32_0 : i32, i32
  }
  func.func @transform_2(%arg0: i32) -> (i32, i32) {
    %c0_i32 = arith.constant 0 : i32
    %c0_i32_0 = arith.constant 0 : i32
    %c0_i32_1 = arith.constant 0 : i32
    return %c0_i32, %c0_i32_0 : i32, i32
  }
  func.func @transform_3(%arg0: i32) -> (i32, i32) {
    %c0_i32 = arith.constant 0 : i32
    %c0_i32_0 = arith.constant 0 : i32
    %c0_i32_1 = arith.constant 0 : i32
    return %c0_i32, %c0_i32_0 : i32, i32
  }
  func.func @transform_4(%arg0: i32) -> (i32, i32) {
    %c0_i32 = arith.constant 0 : i32
    %c0_i32_0 = arith.constant 0 : i32
    %c0_i32_1 = arith.constant 0 : i32
    return %c0_i32, %c0_i32_0 : i32, i32
  }
  func.func @transform_5(%arg0: i32) -> (i32, i32) {
    %c0_i32 = arith.constant 0 : i32
    %c0_i32_0 = arith.constant 0 : i32
    return %arg0, %c0_i32 : i32, i32
  }
}

</mosaic_0001>

<llo_original>
// kernel: tpu_custom_call.1
$region0: #{tpu_custom_call.1}
  #allocation0 [shape = 'u32[]', space=smem, size = 0x4, offset = 0x4, fixed_abs, tag = 'smem constant byte address 0x4 - core index']
  #allocation1 [shape = 'u32[144,128]{1,0:T(1,128)}', space=vmem, size = 0x12000, scoped, tag = 'internal scratch']
  %s0 = inlined_call_operand.hbm [shape: f32[20,128], index: 0, kind: input, shape index: {}]
  %s1 = inlined_call_operand.vmem [shape: f32[128,128], index: 1, kind: input, shape index: {}]
  %s2 = inlined_call_operand.vmem [shape: f32[1,128], index: 2, kind: input, shape index: {}]
  %s3 = inlined_call_operand.vmem [shape: f32[128,2], index: 3, kind: input, shape index: {}]
  %s4 = inlined_call_operand.vmem [shape: f32[1,2], index: 4, kind: input, shape index: {}]
  %s5 = inlined_call_operand.vmem [shape: f32[20,2], index: 5, kind: output, shape index: {}]
  %s6 = sld [smem:[#allocation0]]
  $region34: #{tpu_custom_call.1} parent=0
    _
  %s8 = ssub.s32 1, %s6
  %s9 = scalar_select 0, %s8, %s6
  $region1: #{tpu_custom_call.1} parent=0
    #allocation2 [shape = 'u8[12288]{0}', space=vmem, size = 0x3000, scoped, tag = 'input window, operand 0, single buffered']
    #allocation3 [shape = 's32[1]{0}', space=sflag, size = 0x4, scoped, tag = 'scoped memory for tpu_custom_call.1']
    %10 = vsyncpa [#allocation3], 0
    // Predicated region
    $region2: #{tpu_custom_call.1} parent=1 // pred_check
      _
    $region3: #{tpu_custom_call.1} parent=1 // pred_check_branch
      %12 = sbr.rel (0) target = $region5
    $region4: #{tpu_custom_call.1} parent=1 // pred_region
      %s14 = ssub.s32 384, 384
      %15 = vsyncadd [#allocation3], %s14
      %s16 = sshll.u32 [#allocation2], 4
      %s17 = int_to_ptr.vmem [resolvable:$true] %s16
      %22 = dma.hbm_to_vmem [thread:$0]  %s0, 384, %s17, [#allocation3], 128, 128, 8
    $region5: #{tpu_custom_call.1} parent=1 // pred_fallthru
      _
    // Predicated region
    $region6: #{tpu_custom_call.1} parent=1 // pred_check
      _
    $region7: #{tpu_custom_call.1} parent=1 // pred_check_branch
      %24 = sbr.rel (0) target = $region9
    $region8: #{tpu_custom_call.1} parent=1 // pred_region
      _
    $region9: #{tpu_custom_call.1} parent=1 // pred_fallthru
      _
    // Predicated region
    $region10: #{tpu_custom_call.1} parent=1 // pred_check
      _
    $region11: #{tpu_custom_call.1} parent=1 // pred_check_branch
      %26 = sbr.rel (0) target = $region13
    $region12: #{tpu_custom_call.1} parent=1 // pred_region
      _
    $region13: #{tpu_custom_call.1} parent=1 // pred_fallthru
      _
    // Predicated region
    $region14: #{tpu_custom_call.1} parent=1 // pred_check
      _
    $region15: #{tpu_custom_call.1} parent=1 // pred_check_branch
      %28 = sbr.rel (0) target = $region17
    $region16: #{tpu_custom_call.1} parent=1 // pred_region
      _
    $region17: #{tpu_custom_call.1} parent=1 // pred_fallthru
      _
    // Predicated region
    $region18: #{tpu_custom_call.1} parent=1 // pred_check
      _
    $region19: #{tpu_custom_call.1} parent=1 // pred_check_branch
      %30 = sbr.rel (0) target = $region21
    $region20: #{tpu_custom_call.1} parent=1 // pred_region
      _
    $region21: #{tpu_custom_call.1} parent=1 // pred_fallthru
      _
    // Predicated region
    $region22: #{tpu_custom_call.1} parent=1 // pred_check
      _
    $region23: #{tpu_custom_call.1} parent=1 // pred_check_branch
      %32 = sbr.rel (0) target = $region25
    $region24: #{tpu_custom_call.1} parent=1 // pred_region
      %33 = dma.done [#allocation3], 384
    $region25: #{tpu_custom_call.1} parent=1 // pred_fallthru
      _
    %v34 = vld [vmem:[#allocation2] sm:$0xff]
    %v35 = vld [vmem:[#allocation2 + $0x8] sm:$0xff]
    %v36 = vld [vmem:[#allocation2 + $0x10] sm:$0xf]
    %37 = vrot.lane.b32.xlu0 %v34, 64
    %v38 = vpop.permute.xlu0 %37
    %39 = vrot.lane.b32.xlu0 %v35, 64
    %v40 = vpop.permute.xlu0 %39
    %41 = vrot.lane.b32.xlu0 %v36, 64
    %v42 = vpop.permute.xlu0 %41
    %v43 = vlaneseq
    %v44 = vand.u32 %v43, 127
    %vm45 = vcmp.lt.s32.totalorder %v44, 64
    %v46 = vmul.f32 %v34, %v38
    %v47 = vmul.f32 %v35, %v40
    %v48 = vmul.f32 %v36, %v42
    %v49 = vsub.f32 %v34, %v38
    %v50 = vsub.f32 %v35, %v40
    %v51 = vsub.f32 %v36, %v42
    %v52 = vand.u32 2147483647, %v49
    %v53 = vand.u32 2147483647, %v50
    %v54 = vand.u32 2147483647, %v51
    %v55 = vsel %vm45, %v46, %v52
    %v56 = vsel %vm45, %v47, %v53
    %v57 = vsel %vm45, %v48, %v54
    %v58 = vld [vmem:[%s1] sm:$0xff]
    %v59 = vld [vmem:[%s1 + $0x8] sm:$0xff]
    %v60 = vld [vmem:[%s1 + $0x10] sm:$0xff]
    %v61 = vld [vmem:[%s1 + $0x18] sm:$0xff]
    %v62 = vld [vmem:[%s1 + $0x20] sm:$0xff]
    %v63 = vld [vmem:[%s1 + $0x28] sm:$0xff]
    %v64 = vld [vmem:[%s1 + $0x30] sm:$0xff]
    %v65 = vld [vmem:[%s1 + $0x38] sm:$0xff]
    %v66 = vld [vmem:[%s1 + $0x40] sm:$0xff]
    %v67 = vld [vmem:[%s1 + $0x48] sm:$0xff]
    %v68 = vld [vmem:[%s1 + $0x50] sm:$0xff]
    %v69 = vld [vmem:[%s1 + $0x58] sm:$0xff]
    %v70 = vld [vmem:[%s1 + $0x60] sm:$0xff]
    %v71 = vld [vmem:[%s1 + $0x68] sm:$0xff]
    %v72 = vld [vmem:[%s1 + $0x70] sm:$0xff]
    %v73 = vld [vmem:[%s1 + $0x78] sm:$0xff]
    %v74 = vld [vmem:[%s2] sm:$0x1]
    %v76 = vlaneseq
    %v77 = vshrl.u32 %v76, 7
    %v78 = vsub.s32 0, %v77
    %v79 = vrot.slane %v74, %v78
    %81 = vmatprep.subr.mxu0 0.0
    %82 = vmatpush1.msra.mxu0 %v58
    %83 = vmatprep.subr.mxu0 0.0
    %84 = vmatpush1.msra.mxu0 %v59
    %85 = vmatprep.subr.mxu0 0.0
    %86 = vmatpush1.msra.mxu0 %v60
    %87 = vmatprep.subr.mxu0 0.0
    %88 = vmatpush1.msra.mxu0 %v61
    %89 = vmatprep.subr.mxu0 0.0
    %90 = vmatpush1.msra.mxu0 %v62
    %91 = vmatprep.subr.mxu0 0.0
    %92 = vmatpush1.msra.mxu0 %v63
    %93 = vmatprep.subr.mxu0 0.0
    %94 = vmatpush1.msra.mxu0 %v64
    %95 = vmatprep.subr.mxu0 0.0
    %96 = vmatpush1.msra.mxu0 %v65
    %97 = vmatprep.subr.mxu0 0.0
    %98 = vmatpush1.msra.mxu0 %v66
    %99 = vmatprep.subr.mxu0 0.0
    %100 = vmatpush1.msra.mxu0 %v67
    %101 = vmatprep.subr.mxu0 0.0
    %102 = vmatpush1.msra.mxu0 %v68
    %103 = vmatprep.subr.mxu0 0.0
    %104 = vmatpush1.msra.mxu0 %v69
    %105 = vmatprep.subr.mxu0 0.0
    %106 = vmatpush1.msra.mxu0 %v70
    %107 = vmatprep.subr.mxu0 0.0
    %108 = vmatpush1.msra.mxu0 %v71
    %109 = vmatprep.subr.mxu0 0.0
    %110 = vmatpush1.msra.mxu0 %v72
    %111 = vmatprep.subr.mxu0 0.0
    %112 = vmatpush1.msra.mxu0 %v73
    %113 = vmatprep.subr.mxu0 0.0
    %114 = vmatpush1.msra.mxu0 0.0
    %115 = vmatprep.subr.mxu0 0.0
    %116 = vmatpush1.msra.mxu0 0.0
    %117 = vmatprep.subr.mxu0 0.0
    %118 = vmatpush1.msra.mxu0 0.0
    %119 = vmatprep.subr.mxu0 0.0
    %120 = vmatpush1.msra.mxu0 0.0
    %121 = vmatprep.subr.mxu0 0.0
    %122 = vmatpush1.msra.mxu0 0.0
    %123 = vmatprep.subr.mxu0 0.0
    %124 = vmatpush1.msra.mxu0 0.0
    %125 = vmatprep.subr.mxu0 0.0
    %126 = vmatpush1.msra.mxu0 0.0
    %127 = vmatprep.subr.mxu0 0.0
    %128 = vmatpush1.msra.mxu0 0.0
    %129 = vmatprep.subr.mxu0 0.0
    %130 = vmatpush1.msra.mxu0 0.0
    %131 = vmatprep.subr.mxu0 0.0
    %132 = vmatpush1.msra.mxu0 0.0
    %133 = vmatprep.subr.mxu0 0.0
    %134 = vmatpush1.msra.mxu0 0.0
    %135 = vmatprep.subr.mxu0 0.0
    %136 = vmatpush1.msra.mxu0 0.0
    %137 = vmatprep.subr.mxu0 0.0
    %138 = vmatpush1.msra.mxu0 0.0
    %139 = vmatprep.subr.mxu0 0.0
    %140 = vmatpush1.msra.mxu0 0.0
    %141 = vmatprep.subr.mxu0 0.0
    %142 = vmatpush1.msra.mxu0 0.0
    %143 = vmatprep.subr.mxu0 0.0
    %144 = vmatpush1.msra.mxu0 0.0
    %145 = vmatprep.mubr.f32.mxu0 0.0
    %146 = vmatmul.mubr.f32.gmra.mrb[0].mxu0 %v55
    %v147 = vpop.f32.mrb[0].mxu0
    %v148 = vadd.f32 %v79, %v147
    %v149 = vpop.f32.mrb[0].mxu0
    %150 = vmatprep.mubr.f32.mxu0 0.0
    %151 = vmatmul.mubr.f32.gmra.mrb[0].mxu0 %v56
    %v152 = vpop.f32.mrb[0].mxu0
    %v153 = vadd.f32 %v79, %v152
    %v154 = vpop.f32.mrb[0].mxu0
    %155 = vmatprep.mubr.f32.mxu0 0.0
    %156 = vmatmul.mubr.f32.gmra.mrb[0].mxu0 %v57
    %v157 = vpop.f32.mrb[0].mxu0
    %v158 = vadd.f32 %v79, %v157
    %v159 = vpop.f32.mrb[0].mxu0
    %160 = vdwg.mxu0
    %v161 = vmul.f32 %v148, 0.5
    %v162 = vmul.f32 %v153, 0.5
    %v163 = vmul.f32 %v158, 0.5
    %v164 = vtanh.pop %v161
    %v165 = vtanh.pop %v162
    %v166 = vtanh.pop %v163
    %v167 = vmul.f32 %v164, 0.5
    %v168 = vmul.f32 %v165, 0.5
    %v169 = vmul.f32 %v166, 0.5
    %v170 = vadd.f32 %v167, 0.5
    %v171 = vadd.f32 %v168, 0.5
    %v172 = vadd.f32 %v169, 0.5
    %v173 = vld [vmem:[%s3] sm:$0xff]
    %v174 = vld [vmem:[%s3 + $0x8] sm:$0xff]
    %v175 = vld [vmem:[%s3 + $0x10] sm:$0xff]
    %v176 = vld [vmem:[%s3 + $0x18] sm:$0xff]
    %v177 = vld [vmem:[%s3 + $0x20] sm:$0xff]
    %v178 = vld [vmem:[%s3 + $0x28] sm:$0xff]
    %v179 = vld [vmem:[%s3 + $0x30] sm:$0xff]
    %v180 = vld [vmem:[%s3 + $0x38] sm:$0xff]
    %v181 = vld [vmem:[%s3 + $0x40] sm:$0xff]
    %v182 = vld [vmem:[%s3 + $0x48] sm:$0xff]
    %v183 = vld [vmem:[%s3 + $0x50] sm:$0xff]
    %v184 = vld [vmem:[%s3 + $0x58] sm:$0xff]
    %v185 = vld [vmem:[%s3 + $0x60] sm:$0xff]
    %v186 = vld [vmem:[%s3 + $0x68] sm:$0xff]
    %v187 = vld [vmem:[%s3 + $0x70] sm:$0xff]
    %v188 = vld [vmem:[%s3 + $0x78] sm:$0xff]
    %v189 = vld [vmem:[%s4] sm:$0x1]
    %v191 = vlaneseq
    %v192 = vshrl.u32 %v191, 7
    %v193 = vsub.s32 0, %v192
    %v194 = vrot.slane %v189, %v193
    %196 = vmatprep.subr.mxu0 0.0
    %197 = vmatpush1.msra.mxu0 %v173
    %198 = vmatprep.subr.mxu0 0.0
    %199 = vmatpush1.msra.mxu0 %v174
    %200 = vmatprep.subr.mxu0 0.0
    %201 = vmatpush1.msra.mxu0 %v175
    %202 = vmatprep.subr.mxu0 0.0
    %203 = vmatpush1.msra.mxu0 %v176
    %204 = vmatprep.subr.mxu0 0.0
    %205 = vmatpush1.msra.mxu0 %v177
    %206 = vmatprep.subr.mxu0 0.0
    %207 = vmatpush1.msra.mxu0 %v178
    %208 = vmatprep.subr.mxu0 0.0
    %209 = vmatpush1.msra.mxu0 %v179
    %210 = vmatprep.subr.mxu0 0.0
    %211 = vmatpush1.msra.mxu0 %v180
    %212 = vmatprep.subr.mxu0 0.0
    %213 = vmatpush1.msra.mxu0 %v181
    %214 = vmatprep.subr.mxu0 0.0
    %215 = vmatpush1.msra.mxu0 %v182
    %216 = vmatprep.subr.mxu0 0.0
    %217 = vmatpush1.msra.mxu0 %v183
    %218 = vmatprep.subr.mxu0 0.0
    %219 = vmatpush1.msra.mxu0 %v184
    %220 = vmatprep.subr.mxu0 0.0
    %221 = vmatpush1.msra.mxu0 %v185
    %222 = vmatprep.subr.mxu0 0.0
    %223 = vmatpush1.msra.mxu0 %v186
    %224 = vmatprep.subr.mxu0 0.0
    %225 = vmatpush1.msra.mxu0 %v187
    %226 = vmatprep.subr.mxu0 0.0
    %227 = vmatpush1.msra.mxu0 %v188
    %228 = vmatprep.subr.mxu0 0.0
    %229 = vmatpush1.msra.mxu0 0.0
    %230 = vmatprep.subr.mxu0 0.0
    %231 = vmatpush1.msra.mxu0 0.0
    %232 = vmatprep.subr.mxu0 0.0
    %233 = vmatpush1.msra.mxu0 0.0
    %234 = vmatprep.subr.mxu0 0.0
    %235 = vmatpush1.msra.mxu0 0.0
    %236 = vmatprep.subr.mxu0 0.0
    %237 = vmatpush1.msra.mxu0 0.0
    %238 = vmatprep.subr.mxu0 0.0
    %239 = vmatpush1.msra.mxu0 0.0
    %240 = vmatprep.subr.mxu0 0.0
    %241 = vmatpush1.msra.mxu0 0.0
    %242 = vmatprep.subr.mxu0 0.0
    %243 = vmatpush1.msra.mxu0 0.0
    %244 = vmatprep.subr.mxu0 0.0
    %245 = vmatpush1.msra.mxu0 0.0
    %246 = vmatprep.subr.mxu0 0.0
    %247 = vmatpush1.msra.mxu0 0.0
    %248 = vmatprep.subr.mxu0 0.0
    %249 = vmatpush1.msra.mxu0 0.0
    %250 = vmatprep.subr.mxu0 0.0
    %251 = vmatpush1.msra.mxu0 0.0
    %252 = vmatprep.subr.mxu0 0.0
    %253 = vmatpush1.msra.mxu0 0.0
    %254 = vmatprep.subr.mxu0 0.0
    %255 = vmatpush1.msra.mxu0 0.0
    %256 = vmatprep.subr.mxu0 0.0
    %257 = vmatpush1.msra.mxu0 0.0
    %258 = vmatprep.subr.mxu0 0.0
    %259 = vmatpush1.msra.mxu0 0.0
    %260 = vmatprep.mubr.f32.mxu0 0.0
    %261 = vmatmul.mubr.f32.gmra.mrb[0].mxu0 %v170
    %v262 = vpop.f32.mrb[0].mxu0
    %v263 = vadd.f32 %v194, %v262
    %v264 = vpop.f32.mrb[0].mxu0
    %265 = vmatprep.mubr.f32.mxu0 0.0
    %266 = vmatmul.mubr.f32.gmra.mrb[0].mxu0 %v171
    %v267 = vpop.f32.mrb[0].mxu0
    %v268 = vadd.f32 %v194, %v267
    %v269 = vpop.f32.mrb[0].mxu0
    %270 = vmatprep.mubr.f32.mxu0 0.0
    %271 = vmatmul.mubr.f32.gmra.mrb[0].mxu0 %v172
    %v272 = vpop.f32.mrb[0].mxu0
    %v273 = vadd.f32 %v194, %v272
    %v274 = vpop.f32.mrb[0].mxu0
    %275 = vdwg.mxu0
    %vm276 = vcmask 15360
    %277 = vst.msk [vmem:[%s5] sm:$0xff] %vm276, %v263
    %278 = vst.msk [vmem:[%s5 + $0x8] sm:$0xff] %vm276, %v268
    %vm279 = vcmask 11264
    %280 = vst.msk [vmem:[%s5 + $0x10] sm:$0xf] %vm279, %v273
    // Predicated region
    $region26: #{tpu_custom_call.1} parent=1 // pred_check
      _
    $region27: #{tpu_custom_call.1} parent=1 // pred_check_branch
      %282 = sbr.rel (0) target = $region29
    $region28: #{tpu_custom_call.1} parent=1 // pred_region
      _
    $region29: #{tpu_custom_call.1} parent=1 // pred_fallthru
      _
    // Predicated region
    $region30: #{tpu_custom_call.1} parent=1 // pred_check
      _
    $region31: #{tpu_custom_call.1} parent=1 // pred_check_branch
      %284 = sbr.rel (0) target = $region33
    $region32: #{tpu_custom_call.1} parent=1 // pred_region
      _
    $region33: #{tpu_custom_call.1} parent=1 // pred_fallthru
      _
    %285 = vsyncpa [#allocation3], 1

</llo_original>
